<compile_context>
chip_gen: v7x
topology: tpu7x:2x2x1
jax: 0.10.0
libtpu: 0.0.40
codegen_flags: <defaults>
</compile_context>

<pallas_src>
import functools

import jax
import jax.numpy as jnp
from jax import lax
from jax.experimental import pallas as pl
from jax.experimental.pallas import tpu as pltpu


_HALO = 2  # one halo row per side per depthwise stage; two fused stages


def _double_conv_kernel(x_ref, col_ref, rmask_ref,
                        w1_ref, sh1_ref, w2_ref, sh2_ref, o_ref, *, W, R):
    """One (batch, row-tile) step of the fused DoubleConv.

    x_ref:     (Cin, S)     bf16, row tile (R + 4 rows incl. zero halo), lane-flattened
    col_ref:   (3, S)       f32 column-validity masks for dw = -1 / 0 / +1
    rmask_ref: (1, S)       f32 per-tile row mask (zero for rows outside the image)
    w*_ref:    (Co, 9*Ci)   bf16 combined dw*pw*BN-scale weights
    sh*_ref:   (Co, 1)      f32 folded (dw bias + pw bias + BN) shift
    o_ref:     (Cout, R*W)  emitted (non-halo) rows of this tile
    """
    S = x_ref.shape[-1]
    cols = col_ref[...]                          # (3, S), resident across the grid

    def stack9(z):
        """(C, S) -> (9*C, S): the 9 shifted + column-masked taps stacked on sublanes."""
        parts = []
        for dh in (-1, 0, 1):
            for dc in (-1, 0, 1):
                off = dh * W + dc
                tap = z if off == 0 else pltpu.roll(z, shift=(-off) % S, axis=1)
                if dc != 0:
                    tap = tap * cols[dc + 1:dc + 2, :]
                parts.append(tap)
        return jnp.concatenate(parts, axis=0)

    # ---- stage 1: depthwise3x3 + pointwise1x1 + BN-scale as ONE bf16 MXU matmul
    x = x_ref[...].astype(jnp.float32)                               # (Cin, S)
    y1 = jnp.dot(w1_ref[...], stack9(x).astype(jnp.bfloat16),
                 preferred_element_type=jnp.float32)
    y1 = jnp.maximum(y1 + sh1_ref[...], 0.0)                         # (Cmid, S)
    # zero y1 rows that lie outside the image so stage-2 SAME padding sees zeros
    y1 = y1 * rmask_ref[...]

    # ---- stage 2 (intermediate never touches HBM)
    y2 = jnp.dot(w2_ref[...], stack9(y1).astype(jnp.bfloat16),
                 preferred_element_type=jnp.float32)
    y2 = jnp.maximum(y2 + sh2_ref[...], 0.0)                         # (Cout, S)

    # emit only the R non-halo rows of this tile
    o_ref[...] = y2[:, _HALO * W:_HALO * W + R * W].astype(o_ref.dtype)


def _fold_stage(dw_w, dw_b, pw_w, pw_b, bn_scale, bn_shift):
    """Fold 3x3 taps, dw bias, pw bias and eval-BN into one matmul weight + shift.

    relu(BN(pw(dw(x)+b_dw)+b_pw)) == relu(W' @ stack9(x) + shift)
      W'[o, t*Cin + c] = pw[o, c] * bn_scale[o] * dw[c, t]
      shift[o]         = (pw @ b_dw + b_pw)[o] * bn_scale[o] + bn_shift[o]
    """
    c_in = dw_w.shape[-1]
    c_out = pw_w.shape[1]
    dw_taps = jnp.transpose(dw_w, (2, 0, 1)).reshape(c_in, 9)        # (Cin, 9), t = kh*3+kw
    pw_t = jnp.transpose(pw_w)                                        # (Cout, Cin)
    pw_scaled = pw_t * bn_scale[:, None]                              # BN scale folded in
    w_comb = (pw_scaled[:, None, :] * dw_taps.T[None, :, :]).reshape(c_out, 9 * c_in)
    shift = (pw_t @ dw_b + pw_b) * bn_scale + bn_shift                # (Cout,)
    return w_comb.astype(jnp.bfloat16), shift.reshape(c_out, 1).astype(jnp.float32)


def double_conv(x_nchw, params, *, row_tile=None):
    """Forward of DoubleConv (domain_idx=0). NCHW in/out, f32 I/O."""
    N, Cin, H, W = x_nchw.shape
    Cout = params["pw2_w"].shape[1]
    R = H if row_tile is None else row_tile
    assert H % R == 0, "row_tile must divide H"
    T = H // R
    rows_in = R + 2 * _HALO
    S1 = rows_in * W
    Sp = ((S1 + 127) // 128) * 128        # lane-pad so rolls / loads / stores stay lane-dense

    w1, sh1 = _fold_stage(params["dw1_w"], params["dw1_b"], params["pw1_w"],
                          params["pw1_b"], params["bn1_scale"], params["bn1_shift"])
    w2, sh2 = _fold_stage(params["dw2_w"], params["dw2_b"], params["pw2_w"],
                          params["pw2_b"], params["bn2_scale"], params["bn2_shift"])

    # Row tiles with a 2-row zero halo; bf16 at the HBM boundary (halves input DMA).
    x_pad = jnp.pad(x_nchw.astype(jnp.bfloat16),
                    ((0, 0), (0, 0), (_HALO, _HALO), (0, 0)))
    x_tiles = jnp.stack([x_pad[:, :, t * R:t * R + rows_in, :] for t in range(T)],
                        axis=1).reshape(N, T, Cin, S1)
    if Sp != S1:
        x_tiles = jnp.pad(x_tiles, ((0, 0), (0, 0), (0, 0), (0, Sp - S1)))

    # Hoisted grid-invariant masks (never rebuilt inside the kernel).
    ww = jnp.arange(Sp) % W
    col = jnp.stack([(ww >= 1).astype(jnp.float32),
                     jnp.ones((Sp,), jnp.float32),
                     (ww <= W - 2).astype(jnp.float32)], axis=0)      # (3, Sp)
    ll = jnp.arange(Sp) // W
    rmask = jnp.stack(
        [((t * R - _HALO + ll >= 0) & (t * R - _HALO + ll < H)).astype(jnp.float32)
         for t in range(T)], axis=0).reshape(T, 1, Sp)                # (T, 1, Sp)

    const = lambda a: pl.BlockSpec(a.shape, lambda n, t: (0,) * a.ndim)

    out = pl.pallas_call(
        functools.partial(_double_conv_kernel, W=W, R=R),
        out_shape=jax.ShapeDtypeStruct((N, Cout, H * W), jnp.float32),
        grid=(N, T),
        in_specs=[
            pl.BlockSpec((None, None, Cin, Sp), lambda n, t: (n, t, 0, 0)),
            const(col),
            pl.BlockSpec((None, 1, Sp), lambda n, t: (t, 0, 0)),
            const(w1), const(sh1), const(w2), const(sh2),
        ],
        out_specs=pl.BlockSpec((None, Cout, R * W), lambda n, t: (n, 0, t)),
        compiler_params=pltpu.CompilerParams(
            dimension_semantics=("parallel", "parallel")),
    )(x_tiles, col, rmask, w1, sh1, w2, sh2)

    return out.reshape(N, Cout, H, W)


def init_params(key, in_channels, out_channels, mid_channels=None):
    if mid_channels is None:
        mid_channels = out_channels
    ks = jax.random.split(key, 12)
    eps = 1e-5

    def bn(kg, kb, c):
        gamma = jax.random.normal(kg, (c,), jnp.float32) * 0.1 + 1.0
        beta = jax.random.normal(kb, (c,), jnp.float32) * 0.1
        # running_mean = 0, running_var = 1 (eval-mode BN, folded)
        return gamma / jnp.sqrt(1.0 + eps), beta

    bn1_scale, bn1_shift = bn(ks[8], ks[9], mid_channels)
    bn2_scale, bn2_shift = bn(ks[10], ks[11], out_channels)

    return {
        # depthwise weights stored as (kh, kw, C) == torch (C,1,kh,kw) permuted
        "dw1_w": jax.random.normal(ks[0], (3, 3, in_channels), jnp.float32) * 0.1,
        "dw1_b": jax.random.normal(ks[1], (in_channels,), jnp.float32) * 0.1,
        # pointwise weights stored as (Cin, Cout) == torch (Cout,Cin,1,1) transposed
        "pw1_w": jax.random.normal(ks[2], (in_channels, mid_channels), jnp.float32) * 0.1,
        "pw1_b": jax.random.normal(ks[3], (mid_channels,), jnp.float32) * 0.1,
        "dw2_w": jax.random.normal(ks[4], (3, 3, mid_channels), jnp.float32) * 0.1,
        "dw2_b": jax.random.normal(ks[5], (mid_channels,), jnp.float32) * 0.1,
        "pw2_w": jax.random.normal(ks[6], (mid_channels, out_channels), jnp.float32) * 0.1,
        "pw2_b": jax.random.normal(ks[7], (out_channels,), jnp.float32) * 0.1,
        "bn1_scale": bn1_scale, "bn1_shift": bn1_shift,
        "bn2_scale": bn2_scale, "bn2_shift": bn2_shift,
    }


def _reference(x_nchw, params):
    """Pure-JAX (lax.conv, f32) reference for validation, NCHW in/out."""
    x = jnp.transpose(x_nchw, (0, 2, 3, 1)).astype(jnp.float32)

    def stage(x, dw_w, dw_b, pw_w, pw_b, sc, sh):
        C = x.shape[-1]
        y = lax.conv_general_dilated(
            x, dw_w.reshape(3, 3, 1, C), (1, 1), ((1, 1), (1, 1)),
            dimension_numbers=("NHWC", "HWIO", "NHWC"),
            feature_group_count=C) + dw_b
        y = jnp.einsum("nhwc,cd->nhwd", y, pw_w) + pw_b
        return jnp.maximum(y * sc + sh, 0.0)

    x = stage(x, params["dw1_w"], params["dw1_b"], params["pw1_w"],
              params["pw1_b"], params["bn1_scale"], params["bn1_shift"])
    x = stage(x, params["dw2_w"], params["dw2_b"], params["pw2_w"],
              params["pw2_b"], params["bn2_scale"], params["bn2_shift"])
    return jnp.transpose(x, (0, 3, 1, 2))


if __name__ == "__main__":
    key = jax.random.PRNGKey(0)
    k_x, k_p = jax.random.split(key)

    N, Cin, H, W = 2, 4, 16, 16
    Cout = 8  # mid_channels defaults to out_channels
    x = jax.random.normal(k_x, (N, Cin, H, W), jnp.float32)
    params = init_params(k_p, Cin, Cout)

    ref = jax.block_until_ready(_reference(x, params))

    # Exercise both the row-tiled path (R=8 -> 2 row tiles, halo logic) and the
    # whole-plane path (row_tile=None -> single tile).
    for r in (8, None):
        out = jax.block_until_ready(double_conv(x, params, row_tile=r))
        assert out.shape == (N, Cout, H, W), out.shape
        # bf16 MXU operands -> relaxed tolerance (per perf feedback).
        assert jnp.allclose(out, ref, atol=2e-2, rtol=2e-2), \
            (r, float(jnp.max(jnp.abs(out - ref))))

    print("KERNEL_OK")
</pallas_src>

<mosaic_0001>
module attributes {stable_mosaic.version = 11 : i64} {
  func.func @_double_conv_kernel(%arg0: i32, %arg1: i32, %arg2: memref<1x1x4x256xbf16, #tpu.memory_space<vmem>>, %arg3: memref<3x256xf32, #tpu.memory_space<vmem>>, %arg4: memref<1x1x256xf32, #tpu.memory_space<vmem>>, %arg5: memref<8x36xbf16, #tpu.memory_space<vmem>>, %arg6: memref<8x1xf32, #tpu.memory_space<vmem>>, %arg7: memref<8x72xbf16, #tpu.memory_space<vmem>>, %arg8: memref<8x1xf32, #tpu.memory_space<vmem>>, %arg9: memref<1x8x128xf32, #tpu.memory_space<vmem>>) attributes {dimension_semantics = [#tpu.dimension_semantics<parallel>, #tpu.dimension_semantics<parallel>], iteration_bounds = array<i64: 2, 2>, scalar_prefetch = 0 : i64, scratch_operands = 0 : i64, tpu.core_type = #tpu.core_type<tc>, window_params = [{transform_indices = @transform_0, window_bounds = array<i64: 1, 1, 4, 256>}, {pipeline_mode = #tpu.pipeline_mode<synchronous>, transform_indices = @transform_1, window_bounds = array<i64: 3, 256>}, {transform_indices = @transform_2, window_bounds = array<i64: 1, 1, 256>}, {pipeline_mode = #tpu.pipeline_mode<synchronous>, transform_indices = @transform_3, window_bounds = array<i64: 8, 36>}, {pipeline_mode = #tpu.pipeline_mode<synchronous>, transform_indices = @transform_4, window_bounds = array<i64: 8, 1>}, {pipeline_mode = #tpu.pipeline_mode<synchronous>, transform_indices = @transform_5, window_bounds = array<i64: 8, 72>}, {pipeline_mode = #tpu.pipeline_mode<synchronous>, transform_indices = @transform_6, window_bounds = array<i64: 8, 1>}, {transform_indices = @transform_7, window_bounds = array<i64: 1, 8, 128>}]} {
    %c0 = arith.constant 0 : index
    %c0_0 = arith.constant 0 : index
    %0 = vector.load %arg3[%c0, %c0_0] : memref<3x256xf32, #tpu.memory_space<vmem>>, vector<3x256xf32>
    %c0_1 = arith.constant 0 : index
    %c0_2 = arith.constant 0 : index
    %c0_3 = arith.constant 0 : index
    %c0_4 = arith.constant 0 : index
    %1 = vector.load %arg2[%c0_1, %c0_2, %c0_3, %c0_4] : memref<1x1x4x256xbf16, #tpu.memory_space<vmem>>, vector<1x1x4x256xbf16>
    %2 = vector.shape_cast %1 : vector<1x1x4x256xbf16> to vector<4x256xbf16>
    %3 = arith.extf %2 : vector<4x256xbf16> to vector<4x256xf32>
    %c0_5 = arith.constant 0 : index
    %c0_6 = arith.constant 0 : index
    %4 = vector.load %arg5[%c0_5, %c0_6] : memref<8x36xbf16, #tpu.memory_space<vmem>>, vector<8x36xbf16>
    %c17_i32 = arith.constant 17 : i32
    %5 = tpu.dynamic_rotate %3 by %c17_i32 dim 1 : vector<4x256xf32>, i32 -> vector<4x256xf32>
    %6 = vector.extract_strided_slice %0 {offsets = [0, 0], sizes = [1, 256], strides = [1, 1]} : vector<3x256xf32> to vector<1x256xf32>
    %7 = vector.broadcast %6 : vector<1x256xf32> to vector<4x256xf32>
    %8 = arith.mulf %5, %7 : vector<4x256xf32>
    %c16_i32 = arith.constant 16 : i32
    %9 = tpu.dynamic_rotate %3 by %c16_i32 dim 1 : vector<4x256xf32>, i32 -> vector<4x256xf32>
    %c15_i32 = arith.constant 15 : i32
    %10 = tpu.dynamic_rotate %3 by %c15_i32 dim 1 : vector<4x256xf32>, i32 -> vector<4x256xf32>
    %11 = vector.extract_strided_slice %0 {offsets = [2, 0], sizes = [1, 256], strides = [1, 1]} : vector<3x256xf32> to vector<1x256xf32>
    %12 = vector.broadcast %11 : vector<1x256xf32> to vector<4x256xf32>
    %13 = arith.mulf %10, %12 : vector<4x256xf32>
    %c1_i32 = arith.constant 1 : i32
    %14 = tpu.dynamic_rotate %3 by %c1_i32 dim 1 : vector<4x256xf32>, i32 -> vector<4x256xf32>
    %15 = vector.extract_strided_slice %0 {offsets = [0, 0], sizes = [1, 256], strides = [1, 1]} : vector<3x256xf32> to vector<1x256xf32>
    %16 = vector.broadcast %15 : vector<1x256xf32> to vector<4x256xf32>
    %17 = arith.mulf %14, %16 : vector<4x256xf32>
    %c255_i32 = arith.constant 255 : i32
    %18 = tpu.dynamic_rotate %3 by %c255_i32 dim 1 : vector<4x256xf32>, i32 -> vector<4x256xf32>
    %19 = vector.extract_strided_slice %0 {offsets = [2, 0], sizes = [1, 256], strides = [1, 1]} : vector<3x256xf32> to vector<1x256xf32>
    %20 = vector.broadcast %19 : vector<1x256xf32> to vector<4x256xf32>
    %21 = arith.mulf %18, %20 : vector<4x256xf32>
    %c241_i32 = arith.constant 241 : i32
    %22 = tpu.dynamic_rotate %3 by %c241_i32 dim 1 : vector<4x256xf32>, i32 -> vector<4x256xf32>
    %23 = vector.extract_strided_slice %0 {offsets = [0, 0], sizes = [1, 256], strides = [1, 1]} : vector<3x256xf32> to vector<1x256xf32>
    %24 = vector.broadcast %23 : vector<1x256xf32> to vector<4x256xf32>
    %25 = arith.mulf %22, %24 : vector<4x256xf32>
    %c240_i32 = arith.constant 240 : i32
    %26 = tpu.dynamic_rotate %3 by %c240_i32 dim 1 : vector<4x256xf32>, i32 -> vector<4x256xf32>
    %c239_i32 = arith.constant 239 : i32
    %27 = tpu.dynamic_rotate %3 by %c239_i32 dim 1 : vector<4x256xf32>, i32 -> vector<4x256xf32>
    %28 = vector.extract_strided_slice %0 {offsets = [2, 0], sizes = [1, 256], strides = [1, 1]} : vector<3x256xf32> to vector<1x256xf32>
    %29 = vector.broadcast %28 : vector<1x256xf32> to vector<4x256xf32>
    %30 = arith.mulf %27, %29 : vector<4x256xf32>
    %31 = tpu.concatenate %8, %9, %13, %17, %3, %21, %25, %26, %30 in 0 : vector<4x256xf32>, vector<4x256xf32>, vector<4x256xf32>, vector<4x256xf32>, vector<4x256xf32>, vector<4x256xf32>, vector<4x256xf32>, vector<4x256xf32>, vector<4x256xf32> -> vector<36x256xf32>
    %32 = arith.truncf %31 : vector<36x256xf32> to vector<36x256xbf16>
    %cst = arith.constant dense<0.000000e+00> : vector<8x256xf32>
    %33 = tpu.matmul %4, %32, %cst {dimension_numbers = #tpu.dot_dimension_numbers<[1], [0], [0], [1], [0, 0, 1, 1], [], []>} : vector<8x36xbf16>, vector<36x256xbf16>, vector<8x256xf32> -> vector<8x256xf32>
    %c0_7 = arith.constant 0 : index
    %c0_8 = arith.constant 0 : index
    %34 = vector.load %arg6[%c0_7, %c0_8] : memref<8x1xf32, #tpu.memory_space<vmem>>, vector<8x1xf32>
    %35 = vector.broadcast %34 : vector<8x1xf32> to vector<8x256xf32>
    %36 = arith.addf %33, %35 : vector<8x256xf32>
    %cst_9 = arith.constant 0.000000e+00 : f32
    %37 = vector.broadcast %cst_9 : f32 to vector<8x256xf32>
    %38 = arith.maximumf %36, %37 : vector<8x256xf32>
    %c0_10 = arith.constant 0 : index
    %c0_11 = arith.constant 0 : index
    %c0_12 = arith.constant 0 : index
    %39 = vector.load %arg4[%c0_10, %c0_11, %c0_12] : memref<1x1x256xf32, #tpu.memory_space<vmem>>, vector<1x1x256xf32>
    %40 = vector.shape_cast %39 : vector<1x1x256xf32> to vector<1x256xf32>
    %41 = vector.broadcast %40 : vector<1x256xf32> to vector<8x256xf32>
    %42 = arith.mulf %38, %41 : vector<8x256xf32>
    %c0_13 = arith.constant 0 : index
    %c0_14 = arith.constant 0 : index
    %43 = vector.load %arg7[%c0_13, %c0_14] : memref<8x72xbf16, #tpu.memory_space<vmem>>, vector<8x72xbf16>
    %c17_i32_15 = arith.constant 17 : i32
    %44 = tpu.dynamic_rotate %42 by %c17_i32_15 dim 1 : vector<8x256xf32>, i32 -> vector<8x256xf32>
    %45 = vector.extract_strided_slice %0 {offsets = [0, 0], sizes = [1, 256], strides = [1, 1]} : vector<3x256xf32> to vector<1x256xf32>
    %46 = vector.broadcast %45 : vector<1x256xf32> to vector<8x256xf32>
    %47 = arith.mulf %44, %46 : vector<8x256xf32>
    %c16_i32_16 = arith.constant 16 : i32
    %48 = tpu.dynamic_rotate %42 by %c16_i32_16 dim 1 : vector<8x256xf32>, i32 -> vector<8x256xf32>
    %c15_i32_17 = arith.constant 15 : i32
    %49 = tpu.dynamic_rotate %42 by %c15_i32_17 dim 1 : vector<8x256xf32>, i32 -> vector<8x256xf32>
    %50 = vector.extract_strided_slice %0 {offsets = [2, 0], sizes = [1, 256], strides = [1, 1]} : vector<3x256xf32> to vector<1x256xf32>
    %51 = vector.broadcast %50 : vector<1x256xf32> to vector<8x256xf32>
    %52 = arith.mulf %49, %51 : vector<8x256xf32>
    %c1_i32_18 = arith.constant 1 : i32
    %53 = tpu.dynamic_rotate %42 by %c1_i32_18 dim 1 : vector<8x256xf32>, i32 -> vector<8x256xf32>
    %54 = vector.extract_strided_slice %0 {offsets = [0, 0], sizes = [1, 256], strides = [1, 1]} : vector<3x256xf32> to vector<1x256xf32>
    %55 = vector.broadcast %54 : vector<1x256xf32> to vector<8x256xf32>
    %56 = arith.mulf %53, %55 : vector<8x256xf32>
    %c255_i32_19 = arith.constant 255 : i32
    %57 = tpu.dynamic_rotate %42 by %c255_i32_19 dim 1 : vector<8x256xf32>, i32 -> vector<8x256xf32>
    %58 = vector.extract_strided_slice %0 {offsets = [2, 0], sizes = [1, 256], strides = [1, 1]} : vector<3x256xf32> to vector<1x256xf32>
    %59 = vector.broadcast %58 : vector<1x256xf32> to vector<8x256xf32>
    %60 = arith.mulf %57, %59 : vector<8x256xf32>
    %c241_i32_20 = arith.constant 241 : i32
    %61 = tpu.dynamic_rotate %42 by %c241_i32_20 dim 1 : vector<8x256xf32>, i32 -> vector<8x256xf32>
    %62 = vector.extract_strided_slice %0 {offsets = [0, 0], sizes = [1, 256], strides = [1, 1]} : vector<3x256xf32> to vector<1x256xf32>
    %63 = vector.broadcast %62 : vector<1x256xf32> to vector<8x256xf32>
    %64 = arith.mulf %61, %63 : vector<8x256xf32>
    %c240_i32_21 = arith.constant 240 : i32
    %65 = tpu.dynamic_rotate %42 by %c240_i32_21 dim 1 : vector<8x256xf32>, i32 -> vector<8x256xf32>
    %c239_i32_22 = arith.constant 239 : i32
    %66 = tpu.dynamic_rotate %42 by %c239_i32_22 dim 1 : vector<8x256xf32>, i32 -> vector<8x256xf32>
    %67 = vector.extract_strided_slice %0 {offsets = [2, 0], sizes = [1, 256], strides = [1, 1]} : vector<3x256xf32> to vector<1x256xf32>
    %68 = vector.broadcast %67 : vector<1x256xf32> to vector<8x256xf32>
    %69 = arith.mulf %66, %68 : vector<8x256xf32>
    %70 = tpu.concatenate %47, %48, %52, %56, %42, %60, %64, %65, %69 in 0 : vector<8x256xf32>, vector<8x256xf32>, vector<8x256xf32>, vector<8x256xf32>, vector<8x256xf32>, vector<8x256xf32>, vector<8x256xf32>, vector<8x256xf32>, vector<8x256xf32> -> vector<72x256xf32>
    %71 = arith.truncf %70 : vector<72x256xf32> to vector<72x256xbf16>
    %cst_23 = arith.constant dense<0.000000e+00> : vector<8x256xf32>
    %72 = tpu.matmul %43, %71, %cst_23 {dimension_numbers = #tpu.dot_dimension_numbers<[1], [0], [0], [1], [0, 0, 1, 1], [], []>} : vector<8x72xbf16>, vector<72x256xbf16>, vector<8x256xf32> -> vector<8x256xf32>
    %c0_24 = arith.constant 0 : index
    %c0_25 = arith.constant 0 : index
    %73 = vector.load %arg8[%c0_24, %c0_25] : memref<8x1xf32, #tpu.memory_space<vmem>>, vector<8x1xf32>
    %74 = vector.broadcast %73 : vector<8x1xf32> to vector<8x256xf32>
    %75 = arith.addf %72, %74 : vector<8x256xf32>
    %cst_26 = arith.constant 0.000000e+00 : f32
    %76 = vector.broadcast %cst_26 : f32 to vector<8x256xf32>
    %77 = arith.maximumf %75, %76 : vector<8x256xf32>
    %78 = vector.extract_strided_slice %77 {offsets = [0, 32], sizes = [8, 128], strides = [1, 1]} : vector<8x256xf32> to vector<8x128xf32>
    %c0_27 = arith.constant 0 : index
    %c0_28 = arith.constant 0 : index
    %c0_29 = arith.constant 0 : index
    %79 = vector.load %arg9[%c0_27, %c0_28, %c0_29] : memref<1x8x128xf32, #tpu.memory_space<vmem>>, vector<1x8x128xf32>
    %80 = vector.shape_cast %79 : vector<1x8x128xf32> to vector<8x128xf32>
    %81 = vector.shape_cast %78 : vector<8x128xf32> to vector<1x8x128xf32>
    tpu.vector_store %arg9[%c0_27, %c0_28, %c0_29], %81 {strides = array<i32>} : memref<1x8x128xf32, #tpu.memory_space<vmem>>, vector<1x8x128xf32>,
    return
  }
  func.func @transform_0(%arg0: i32, %arg1: i32) -> (i32, i32, i32, i32) {
    %c0_i32 = arith.constant 0 : i32
    %c0_i32_0 = arith.constant 0 : i32
    %c0_i32_1 = arith.constant 0 : i32
    return %arg0, %arg1, %c0_i32, %c0_i32_0 : i32, i32, i32, i32
  }
  func.func @transform_1(%arg0: i32, %arg1: i32) -> (i32, i32) {
    %c0_i32 = arith.constant 0 : i32
    %c0_i32_0 = arith.constant 0 : i32
    %c0_i32_1 = arith.constant 0 : i32
    return %c0_i32, %c0_i32_0 : i32, i32
  }
  func.func @transform_2(%arg0: i32, %arg1: i32) -> (i32, i32, i32) {
    %c0_i32 = arith.constant 0 : i32
    %c0_i32_0 = arith.constant 0 : i32
    %c0_i32_1 = arith.constant 0 : i32
    return %arg1, %c0_i32, %c0_i32_0 : i32, i32, i32
  }
  func.func @transform_3(%arg0: i32, %arg1: i32) -> (i32, i32) {
    %c0_i32 = arith.constant 0 : i32
    %c0_i32_0 = arith.constant 0 : i32
    %c0_i32_1 = arith.constant 0 : i32
    return %c0_i32, %c0_i32_0 : i32, i32
  }
  func.func @transform_4(%arg0: i32, %arg1: i32) -> (i32, i32) {
    %c0_i32 = arith.constant 0 : i32
    %c0_i32_0 = arith.constant 0 : i32
    %c0_i32_1 = arith.constant 0 : i32
    return %c0_i32, %c0_i32_0 : i32, i32
  }
  func.func @transform_5(%arg0: i32, %arg1: i32) -> (i32, i32) {
    %c0_i32 = arith.constant 0 : i32
    %c0_i32_0 = arith.constant 0 : i32
    %c0_i32_1 = arith.constant 0 : i32
    return %c0_i32, %c0_i32_0 : i32, i32
  }
  func.func @transform_6(%arg0: i32, %arg1: i32) -> (i32, i32) {
    %c0_i32 = arith.constant 0 : i32
    %c0_i32_0 = arith.constant 0 : i32
    %c0_i32_1 = arith.constant 0 : i32
    return %c0_i32, %c0_i32_0 : i32, i32
  }
  func.func @transform_7(%arg0: i32, %arg1: i32) -> (i32, i32, i32) {
    %c0_i32 = arith.constant 0 : i32
    %c0_i32_0 = arith.constant 0 : i32
    return %arg0, %c0_i32, %arg1 : i32, i32, i32
  }
}

</mosaic_0001>

<llo_original>
// kernel: tpu_custom_call.1
$region0: #{tpu_custom_call.1}
  #allocation0 [shape = 'u32[]', space=smem, size = 0x4, offset = 0x4, fixed_abs, tag = 'smem constant byte address 0x4 - core index']
  #allocation1 [shape = 'u32[144,128]{1,0:T(1,128)}', space=vmem, size = 0x12000, scoped, tag = 'internal scratch']
  %s0 = inlined_call_operand.vmem [shape: bf16[2,2,4,256], index: 0, kind: input, shape index: {}]
  %s1 = inlined_call_operand.hbm [shape: f32[3,256], index: 1, kind: input, shape index: {}]
  %s2 = inlined_call_operand.vmem [shape: f32[2,1,256], index: 2, kind: input, shape index: {}]
  %s3 = inlined_call_operand.vmem [shape: bf16[8,36], index: 3, kind: input, shape index: {}]
  %s4 = inlined_call_operand.vmem [shape: f32[8,1], index: 4, kind: input, shape index: {}]
  %s5 = inlined_call_operand.vmem [shape: bf16[8,72], index: 5, kind: input, shape index: {}]
  %s6 = inlined_call_operand.vmem [shape: f32[8,1], index: 6, kind: input, shape index: {}]
  %s7 = inlined_call_operand.hbm [shape: f32[2,8,256], index: 7, kind: output, shape index: {}]
  %s8 = sld [smem:[#allocation0]]
  $region65: #{tpu_custom_call.1} parent=0
    _
  %s10 = ssub.s32 1, %s8
  %s11 = scalar_select 0, %s10, %s8
  $region1: #{tpu_custom_call.1} parent=0
    #allocation2 [shape = 'u8[4096]{0}', space=vmem, size = 0x1000, scoped, tag = 'input window, operand 1, single buffered']
    #allocation3 [shape = 's32[2]{0}', space=sflag, size = 0x8, scoped, tag = 'scoped memory for tpu_custom_call.1']
    #allocation4 [shape = 's32[2]{0}', space=sflag, size = 0x8, scoped, tag = 'scoped memory for tpu_custom_call.1']
    #allocation5 [shape = 'u8[8192]{0}', space=vmem, size = 0x2000, scoped, tag = 'output window, operand 0']
    %12 = vsyncpa [#allocation3], 0
    %13 = vsyncpa [#allocation4], 0
    %s14 = scalar_lea.sflag [#allocation4], 1
    %15 = vsyncpa %s14, 0
    loop: start=0, step=1, limit=6
    $region2: #{tpu_custom_call.1} parent=1 // loop_pre_header
      _
    $region3: #{tpu_custom_call.1} parent=1 // loop_header
      %s17 = sphi 0, %s21
      %p18 = scmp.ge.s32.totalorder %s17, 6
      %s24 = sphi 0, %s36
      %s25 = sphi 0, %s32
      %s26 = sphi 0, %s24
      %s27 = sphi 0, %s25
      %s28 = sphi 0, %s26
      %s29 = sphi 0, %s27
      %s41 = sphi 0, %s43
      %s44 = sphi 0, %s41
      %s45 = sphi 0, %s44
      %s61 = sphi 0, %s45
      %s65 = sphi 0, %s65
      %s67 = sphi 0, %s65
      %s68 = sphi 0, %s67
      %s82 = sphi 0, %s68
      %s88 = sphi 0, %s90
      %s91 = sphi 0, %s88
      %s92 = sphi 0, %s91
      %s108 = sphi 0, %s92
      %s112 = sphi 0, %s112
      %s114 = sphi 0, %s112
      %s115 = sphi 0, %s114
      %s129 = sphi 0, %s115
      %s133 = sphi 0, %s133
      %s135 = sphi 0, %s133
      %s136 = sphi 0, %s135
      %s150 = sphi 0, %s136
      %s154 = sphi 0, %s154
      %s156 = sphi 0, %s154
      %s157 = sphi 0, %s156
      %s171 = sphi 0, %s157
      %s175 = sphi 0, %s175
      %s177 = sphi 0, %s175
      %s178 = sphi 0, %s177
      %s192 = sphi 0, %s178
      %s200 = sphi 0, %s202
      %s203 = sphi 0, %s200
      %s204 = sphi 0, %s203
      %s220 = sphi 0, %s204
    $region4: #{tpu_custom_call.1} parent=1 // loop_header_branch
      %20 = sbr.rel (%p18) target = $region8
    $region5: #{tpu_custom_call.1} parent=1 // loop_body
      %s22 = ssub.s32 %s17, 1
      %s23 = ssub.s32 %s17, 2
      %s30 = sadd.s32 1, %s25
      %p31 = scmp.ge.s32.totalorder %s30, 2
      %s32 = scalar_select %p31, 0, %s30
      %s33 = sadd.s32 1, %s24
      %s34 = scalar_select %p31, %s33, %s24
      %p35 = scmp.ge.s32.totalorder %s34, 2
      %s36 = scalar_select %p35, 0, %s34
      %s37 = ssub.s32 %s24, %s36
      %s38 = ssub.s32 %s25, %s32
      %s39 = sor.u32 %s37, %s38
      %p40 = scmp.eq.s32.totalorder %s39, 0
      %s42 = sadd.s32 %s41, 1
      %s43 = scalar_select %p40, %s41, %s42
      %p46 = pneg %p40
      %p47 = scmp.eq.s32.totalorder %s17, 3
      %p48 = por %p46, %p47
      %p49 = scmp.ne.s32.totalorder %s41, %s44
      %p50 = scmp.eq.s32.totalorder %s17, 0
      %p51 = por %p49, %p50
      %p52 = scmp.ne.s32.totalorder %s41, %s44
      %p53 = scmp.eq.s32.totalorder %s22, 3
      %p54 = por %p52, %p53
      %p55 = scmp.ne.s32.totalorder %s44, %s45
      %p56 = scmp.eq.s32.totalorder %s22, 0
      %p57 = por %p55, %p56
      %p58 = scmp.ne.s32.totalorder %s44, %s45
      %p59 = scmp.eq.s32.totalorder %s23, 3
      %p60 = por %p58, %p59
      %p62 = scmp.ne.s32.totalorder %s45, %s61
      %p63 = scmp.eq.s32.totalorder %s23, 0
      %p64 = por %p62, %p63
      %s66 = sadd.s32 %s65, 1
      %p69 = scmp.eq.s32.totalorder %s17, 3
      %p70 = scmp.ne.s32.totalorder %s65, %s67
      %p71 = scmp.eq.s32.totalorder %s17, 0
      %p72 = por %p70, %p71
      %p73 = scmp.ne.s32.totalorder %s65, %s67
      %p74 = scmp.eq.s32.totalorder %s22, 3
      %p75 = por %p73, %p74
      %p76 = scmp.ne.s32.totalorder %s67, %s68
      %p77 = scmp.eq.s32.totalorder %s22, 0
      %p78 = por %p76, %p77
      %p79 = scmp.ne.s32.totalorder %s67, %s68
      %p80 = scmp.eq.s32.totalorder %s23, 3
      %p81 = por %p79, %p80
      %p83 = scmp.ne.s32.totalorder %s68, %s82
      %p84 = scmp.eq.s32.totalorder %s23, 0
      %p85 = por %p83, %p84
      %s86 = ssub.s32 %s25, %s32
      %p87 = scmp.eq.s32.totalorder %s86, 0
      %s89 = sadd.s32 %s88, 1
      %s90 = scalar_select %p87, %s88, %s89
      %p93 = pneg %p87
      %p94 = scmp.eq.s32.totalorder %s17, 3
      %p95 = por %p93, %p94
      %p96 = scmp.ne.s32.totalorder %s88, %s91
      %p97 = scmp.eq.s32.totalorder %s17, 0
      %p98 = por %p96, %p97
      %p99 = scmp.ne.s32.totalorder %s88, %s91
      %p100 = scmp.eq.s32.totalorder %s22, 3
      %p101 = por %p99, %p100
      %p102 = scmp.ne.s32.totalorder %s91, %s92
      %p103 = scmp.eq.s32.totalorder %s22, 0
      %p104 = por %p102, %p103
      %p105 = scmp.ne.s32.totalorder %s91, %s92
      %p106 = scmp.eq.s32.totalorder %s23, 3
      %p107 = por %p105, %p106
      %p109 = scmp.ne.s32.totalorder %s92, %s108
      %p110 = scmp.eq.s32.totalorder %s23, 0
      %p111 = por %p109, %p110
      %s113 = sadd.s32 %s112, 1
      %p116 = scmp.eq.s32.totalorder %s17, 3
      %p117 = scmp.ne.s32.totalorder %s112, %s114
      %p118 = scmp.eq.s32.totalorder %s17, 0
      %p119 = por %p117, %p118
      %p120 = scmp.ne.s32.totalorder %s112, %s114
      %p121 = scmp.eq.s32.totalorder %s22, 3
      %p122 = por %p120, %p121
      %p123 = scmp.ne.s32.totalorder %s114, %s115
      %p124 = scmp.eq.s32.totalorder %s22, 0
      %p125 = por %p123, %p124
      %p126 = scmp.ne.s32.totalorder %s114, %s115
      %p127 = scmp.eq.s32.totalorder %s23, 3
      %p128 = por %p126, %p127
      %p130 = scmp.ne.s32.totalorder %s115, %s129
      %p131 = scmp.eq.s32.totalorder %s23, 0
      %p132 = por %p130, %p131
      %s134 = sadd.s32 %s133, 1
      %p137 = scmp.eq.s32.totalorder %s17, 3
      %p138 = scmp.ne.s32.totalorder %s133, %s135
      %p139 = scmp.eq.s32.totalorder %s17, 0
      %p140 = por %p138, %p139
      %p141 = scmp.ne.s32.totalorder %s133, %s135
      %p142 = scmp.eq.s32.totalorder %s22, 3
      %p143 = por %p141, %p142
      %p144 = scmp.ne.s32.totalorder %s135, %s136
      %p145 = scmp.eq.s32.totalorder %s22, 0
      %p146 = por %p144, %p145
      %p147 = scmp.ne.s32.totalorder %s135, %s136
      %p148 = scmp.eq.s32.totalorder %s23, 3
      %p149 = por %p147, %p148
      %p151 = scmp.ne.s32.totalorder %s136, %s150
      %p152 = scmp.eq.s32.totalorder %s23, 0
      %p153 = por %p151, %p152
      %s155 = sadd.s32 %s154, 1
      %p158 = scmp.eq.s32.totalorder %s17, 3
      %p159 = scmp.ne.s32.totalorder %s154, %s156
      %p160 = scmp.eq.s32.totalorder %s17, 0
      %p161 = por %p159, %p160
      %p162 = scmp.ne.s32.totalorder %s154, %s156
      %p163 = scmp.eq.s32.totalorder %s22, 3
      %p164 = por %p162, %p163
      %p165 = scmp.ne.s32.totalorder %s156, %s157
      %p166 = scmp.eq.s32.totalorder %s22, 0
      %p167 = por %p165, %p166
      %p168 = scmp.ne.s32.totalorder %s156, %s157
      %p169 = scmp.eq.s32.totalorder %s23, 3
      %p170 = por %p168, %p169
      %p172 = scmp.ne.s32.totalorder %s157, %s171
      %p173 = scmp.eq.s32.totalorder %s23, 0
      %p174 = por %p172, %p173
      %s176 = sadd.s32 %s175, 1
      %p179 = scmp.eq.s32.totalorder %s17, 3
      %p180 = scmp.ne.s32.totalorder %s175, %s177
      %p181 = scmp.eq.s32.totalorder %s17, 0
      %p182 = por %p180, %p181
      %p183 = scmp.ne.s32.totalorder %s175, %s177
      %p184 = scmp.eq.s32.totalorder %s22, 3
      %p185 = por %p183, %p184
      %p186 = scmp.ne.s32.totalorder %s177, %s178
      %p187 = scmp.eq.s32.totalorder %s22, 0
      %p188 = por %p186, %p187
      %p189 = scmp.ne.s32.totalorder %s177, %s178
      %p190 = scmp.eq.s32.totalorder %s23, 3
      %p191 = por %p189, %p190
      %p193 = scmp.ne.s32.totalorder %s178, %s192
      %p194 = scmp.eq.s32.totalorder %s23, 0
      %p195 = por %p193, %p194
      %s196 = ssub.s32 %s24, %s36
      %s197 = ssub.s32 %s25, %s32
      %s198 = sor.u32 %s196, %s197
      %p199 = scmp.eq.s32.totalorder %s198, 0
      %s201 = sadd.s32 %s200, 1
      %s202 = scalar_select %p199, %s200, %s201
      %p205 = pneg %p199
      %p206 = scmp.eq.s32.totalorder %s17, 3
      %p207 = por %p205, %p206
      %p208 = scmp.ne.s32.totalorder %s200, %s203
      %p209 = scmp.eq.s32.totalorder %s17, 0
      %p210 = por %p208, %p209
      %p211 = scmp.ne.s32.totalorder %s200, %s203
      %p212 = scmp.eq.s32.totalorder %s22, 3
      %p213 = por %p211, %p212
      %p214 = scmp.ne.s32.totalorder %s203, %s204
      %p215 = scmp.eq.s32.totalorder %s22, 0
      %p216 = por %p214, %p215
      %p217 = scmp.ne.s32.totalorder %s203, %s204
      %p218 = scmp.eq.s32.totalorder %s23, 3
      %p219 = por %p217, %p218
      %p221 = scmp.ne.s32.totalorder %s204, %s220
      %p222 = scmp.eq.s32.totalorder %s23, 0
      %p223 = por %p221, %p222
      %p224 = scmp.le.s32.totalorder 1, %s17
      %p225 = scmp.lt.s32.totalorder %s17, 5
      %p226 = pnand %p224, %p225
      %p227 = pneg %p226
      // Predicated region
      $region9: #{tpu_custom_call.1} parent=5 // pred_check
        _
      $region10: #{tpu_custom_call.1} parent=5 // pred_check_branch
        %229 = sbr.rel (%p226) target = $region12
      $region11: #{tpu_custom_call.1} parent=5 // pred_region
        %s230 = ssub.s32 %s17, 1
        // Predicated region
        $region13: #{tpu_custom_call.1} parent=11 // pred_check
          %p231 = pneg %p78
        $region14: #{tpu_custom_call.1} parent=11 // pred_check_branch
          %233 = sbr.rel (%p231) target = $region16
        $region15: #{tpu_custom_call.1} parent=11 // pred_region
          %s235 = ssub.s32 128, 128
          %236 = vsyncadd [#allocation3], %s235
          %s238 = sshll.u32 [#allocation2], 4
          %s239 = int_to_ptr.vmem [resolvable:$true] %s238
          %241 = dma.hbm_to_vmem [thread:$0]  %s1, 128, %s239, [#allocation3]
        $region16: #{tpu_custom_call.1} parent=11 // pred_fallthru
          _
        // Predicated region
        $region17: #{tpu_custom_call.1} parent=11 // pred_check
          %p242 = pneg %p125
        $region18: #{tpu_custom_call.1} parent=11 // pred_check_branch
          %244 = sbr.rel (%p242) target = $region20
        $region19: #{tpu_custom_call.1} parent=11 // pred_region
          _
        $region20: #{tpu_custom_call.1} parent=11 // pred_fallthru
          _
        // Predicated region
        $region21: #{tpu_custom_call.1} parent=11 // pred_check
          %p245 = pneg %p146
        $region22: #{tpu_custom_call.1} parent=11 // pred_check_branch
          %247 = sbr.rel (%p245) target = $region24
        $region23: #{tpu_custom_call.1} parent=11 // pred_region
          _
        $region24: #{tpu_custom_call.1} parent=11 // pred_fallthru
          _
        // Predicated region
        $region25: #{tpu_custom_call.1} parent=11 // pred_check
          %p248 = pneg %p167
        $region26: #{tpu_custom_call.1} parent=11 // pred_check_branch
          %250 = sbr.rel (%p248) target = $region28
        $region27: #{tpu_custom_call.1} parent=11 // pred_region
          _
        $region28: #{tpu_custom_call.1} parent=11 // pred_fallthru
          _
        // Predicated region
        $region29: #{tpu_custom_call.1} parent=11 // pred_check
          %p251 = pneg %p188
        $region30: #{tpu_custom_call.1} parent=11 // pred_check_branch
          %253 = sbr.rel (%p251) target = $region32
        $region31: #{tpu_custom_call.1} parent=11 // pred_region
          _
        $region32: #{tpu_custom_call.1} parent=11 // pred_fallthru
          _
      $region12: #{tpu_custom_call.1} parent=5 // pred_fallthru
        _
      %p254 = scmp.lt.s32.totalorder %s17, 4
      // Predicated region
      $region33: #{tpu_custom_call.1} parent=5 // pred_check
        %p255 = pneg %p254
      $region34: #{tpu_custom_call.1} parent=5 // pred_check_branch
        %257 = sbr.rel (%p255) target = $region36
      $region35: #{tpu_custom_call.1} parent=5 // pred_region
        // Predicated region
        $region37: #{tpu_custom_call.1} parent=35 // pred_check
          %p258 = pneg %p51
        $region38: #{tpu_custom_call.1} parent=35 // pred_check_branch
          %260 = sbr.rel (%p258) target = $region40
        $region39: #{tpu_custom_call.1} parent=35 // pred_region
          %p261 = scmp.lt.s32.totalorder %s24, 1
          %s262 = scalar_select %p261, %s24, 1
          %p263 = scmp.lt.s32.totalorder %s25, 1
          %s264 = scalar_select %p263, %s25, 1
          %s265 = smul.addr %s264, 2
          %s266 = smul.addr %s262, 4
          %s267 = sadd.s32 %s265, %s266
          %s268 = smul.addr %s267, 2
          %s269 = scalar_lea.vmem %s0, %s268
        $region40: #{tpu_custom_call.1} parent=35 // pred_fallthru
          _
        // Predicated region
        $region41: #{tpu_custom_call.1} parent=35 // pred_check
          %p270 = pneg %p98
        $region42: #{tpu_custom_call.1} parent=35 // pred_check_branch
          %272 = sbr.rel (%p270) target = $region44
        $region43: #{tpu_custom_call.1} parent=35 // pred_region
          %p273 = scmp.lt.s32.totalorder %s25, 1
          %s274 = scalar_select %p273, %s25, 1
          %s275 = smul.addr %s274, 2
          %s276 = scalar_lea.vmem %s2, %s275
        $region44: #{tpu_custom_call.1} parent=35 // pred_fallthru
          _
      $region36: #{tpu_custom_call.1} parent=5 // pred_fallthru
        _
      %p277 = scmp.le.s32.totalorder 1, %s17
      %p278 = scmp.lt.s32.totalorder %s17, 5
      %p279 = pnand %p277, %p278
      %p280 = pneg %p279
      // Predicated region
      $region45: #{tpu_custom_call.1} parent=5 // pred_check
        _
      $region46: #{tpu_custom_call.1} parent=5 // pred_check_branch
        %282 = sbr.rel (%p279) target = $region48
      $region47: #{tpu_custom_call.1} parent=5 // pred_region
        %s283 = ssub.s32 %s17, 1
        // Predicated region
        $region49: #{tpu_custom_call.1} parent=47 // pred_check
          %p284 = pneg %p78
        $region50: #{tpu_custom_call.1} parent=47 // pred_check_branch
          %286 = sbr.rel (%p284) target = $region52
        $region51: #{tpu_custom_call.1} parent=47 // pred_region
          %287 = dma.done [#allocation3], 128
        $region52: #{tpu_custom_call.1} parent=47 // pred_fallthru
          _
        %p288 = scmp.lt.s32.totalorder %s26, 1
        %s289 = scalar_select %p288, %s26, 1
        %p290 = scmp.lt.s32.totalorder %s27, 1
        %s291 = scalar_select %p290, %s27, 1
        %s292 = smul.addr %s291, 2
        %s293 = smul.addr %s289, 4
        %s294 = sadd.s32 %s292, %s293
        %s295 = smul.addr %s294, 2
        %s296 = scalar_lea.vmem %s0, %s295
        %p297 = pneg %p57
        %p298 = pneg %p54
        %p299 = pneg %p78
        %p300 = pneg %p75
        %p301 = scmp.lt.s32.totalorder %s27, 1
        %s302 = scalar_select %p301, %s27, 1
        %s303 = smul.addr %s302, 2
        %s304 = scalar_lea.vmem %s2, %s303
        %p305 = pneg %p104
        %p306 = pneg %p101
        %p307 = pneg %p125
        %p308 = pneg %p122
        %p309 = pneg %p146
        %p310 = pneg %p143
        %p311 = pneg %p167
        %p312 = pneg %p164
        %p313 = pneg %p188
        %p314 = pneg %p185
        %p315 = pneg %p216
        %p316 = pneg %p213
        %s317 = sand.u32 %s203, 1
        %s318 = scalar_lea.sflag [#allocation4], %s317
        %s319 = sand.u32 %s203, 1
        %s320 = smul.addr %s319, 8
        %s321 = scalar_lea.vmem [#allocation5], %s320
        %p322 = scmp.lt.s32.totalorder %s26, 1
        %s323 = scalar_select %p322, %s26, 1
        %p324 = scmp.lt.s32.totalorder %s27, 1
        %s325 = scalar_select %p324, %s27, 1
        %s326 = smul.addr %s325, 2
        %s327 = smul.addr %s323, 4
        %s328 = sadd.s32 %s326, %s327
        %s329 = smul.addr %s328, 2
        %s330 = scalar_lea.vmem %s0, %s329
        %p331 = scmp.lt.s32.totalorder %s27, 1
        %s332 = scalar_select %p331, %s27, 1
        %s333 = smul.addr %s332, 2
        %s334 = scalar_lea.vmem %s2, %s333
        %v336 = vld [vmem:[#allocation2] sm:$0x77]
        %v337 = vld [vmem:[%s330] sm:$0xf]
        %v338 = vunpack.c.l.bf16 %v337
        %v339 = vld [vmem:[%s3] sm:$0xf]
        %v341 = vcombine.high %v338, %v338
        %343 = vrot.lane.b32.xlu0 %v338, 17
        %v344 = vpop.permute.xlu0 %343
        %345 = vrot.lane.b32.xlu0 %v341, 17
        %v346 = vpop.permute.xlu0 %345
        %v347 = vlaneseq
        %v348 = vand.u32 %v347, 127
        %vm349 = vcmp.lt.s32.totalorder %v348, 17
        %v350 = vsel %vm349, %v344, %v346
        %v351 = vsel %vm349, %v346, %v344
        %v353 = vlaneseq
        %v354 = vshrl.u32 %v353, 7
        %v355 = vsub.s32 0, %v354
        %v356 = vrot.slane %v336, %v355
        %v357 = vlaneseq
        %v358 = vshrl.u32 %v357, 7
        %v359 = vsub.s32 4, %v358
        %v360 = vrot.slane %v336, %v359
        %v363 = vlaneseq
        %v364 = vshrl.u32 %v363, 7
        %v365 = vsub.s32 0, %v364
        %v366 = vrot.slane %v356, %v365
        %v367 = vlaneseq
        %v368 = vshrl.u32 %v367, 7
        %v369 = vsub.s32 0, %v368
        %v370 = vrot.slane %v360, %v369
        %v371 = vmul.f32 %v351, %v366
        %v372 = vmul.f32 %v350, %v370
        %373 = vrot.lane.b32.xlu0 %v338, 16
        %v374 = vpop.permute.xlu0 %373
        %375 = vrot.lane.b32.xlu0 %v341, 16
        %v376 = vpop.permute.xlu0 %375
        %vm377 = vcmp.lt.s32.totalorder %v348, 16
        %v378 = vsel %vm377, %v374, %v376
        %v379 = vsel %vm377, %v376, %v374
        %380 = vrot.lane.b32.xlu0 %v338, 15
        %v381 = vpop.permute.xlu0 %380
        %382 = vrot.lane.b32.xlu0 %v341, 15
        %v383 = vpop.permute.xlu0 %382
        %vm384 = vcmp.lt.s32.totalorder %v348, 15
        %v385 = vsel %vm384, %v381, %v383
        %v386 = vsel %vm384, %v383, %v381
        %v387 = vlaneseq
        %v388 = vshrl.u32 %v387, 7
        %v389 = vsub.s32 2, %v388
        %v390 = vrot.slane %v336, %v389
        %v391 = vlaneseq
        %v392 = vshrl.u32 %v391, 7
        %v393 = vsub.s32 6, %v392
        %v394 = vrot.slane %v336, %v393
        %v397 = vlaneseq
        %v398 = vshrl.u32 %v397, 7
        %v399 = vsub.s32 2, %v398
        %v400 = vrot.slane %v390, %v399
        %v401 = vlaneseq
        %v402 = vshrl.u32 %v401, 7
        %v403 = vsub.s32 2, %v402
        %v404 = vrot.slane %v394, %v403
        %v405 = vmul.f32 %v386, %v400
        %v406 = vmul.f32 %v385, %v404
        %407 = vrot.lane.b32.xlu0 %v338, 1
        %v408 = vpop.permute.xlu0 %407
        %409 = vrot.lane.b32.xlu0 %v341, 1
        %v410 = vpop.permute.xlu0 %409
        %vm411 = vcmp.lt.s32.totalorder %v348, 1
        %v412 = vsel %vm411, %v408, %v410
        %v413 = vsel %vm411, %v410, %v408
        %v414 = vmul.f32 %v413, %v366
        %v415 = vmul.f32 %v412, %v370
        %416 = vrot.lane.b32.xlu0 %v338, 127
        %v417 = vpop.permute.xlu0 %416
        %418 = vrot.lane.b32.xlu0 %v341, 127
        %v419 = vpop.permute.xlu0 %418
        %vm420 = vcmp.lt.s32.totalorder %v348, 127
        %v421 = vsel %vm420, %v417, %v419
        %v422 = vsel %vm420, %v419, %v417
        %v423 = vmul.f32 %v421, %v400
        %v424 = vmul.f32 %v422, %v404
        %425 = vrot.lane.b32.xlu0 %v338, 113
        %v426 = vpop.permute.xlu0 %425
        %427 = vrot.lane.b32.xlu0 %v341, 113
        %v428 = vpop.permute.xlu0 %427
        %vm429 = vcmp.lt.s32.totalorder %v348, 113
        %v430 = vsel %vm429, %v426, %v428
        %v431 = vsel %vm429, %v428, %v426
        %v432 = vmul.f32 %v430, %v366
        %v433 = vmul.f32 %v431, %v370
        %434 = vrot.lane.b32.xlu0 %v338, 112
        %v435 = vpop.permute.xlu0 %434
        %436 = vrot.lane.b32.xlu0 %v341, 112
        %v437 = vpop.permute.xlu0 %436
        %vm438 = vcmp.lt.s32.totalorder %v348, 112
        %v439 = vsel %vm438, %v435, %v437
        %v440 = vsel %vm438, %v437, %v435
        %441 = vrot.lane.b32.xlu0 %v338, 111
        %v442 = vpop.permute.xlu0 %441
        %443 = vrot.lane.b32.xlu0 %v341, 111
        %v444 = vpop.permute.xlu0 %443
        %vm445 = vcmp.lt.s32.totalorder %v348, 111
        %v446 = vsel %vm445, %v442, %v444
        %v447 = vsel %vm445, %v444, %v442
        %v448 = vmul.f32 %v446, %v400
        %v449 = vmul.f32 %v447, %v404
        %v452 = vrot.slane %v379, 4
        %v453 = vrot.slane %v378, 4
        %v458 = vrot.slane %v414, 4
        %v459 = vrot.slane %v415, 4
        %v464 = vrot.slane %v423, 4
        %v465 = vrot.slane %v424, 4
        %v470 = vrot.slane %v439, 4
        %v471 = vrot.slane %v440, 4
        %vm474 = vcmask 1043456
        %v475 = vsel %vm474, %v371, %v452
        %v476 = vsel %vm474, %v372, %v453
        %v477 = vsel %vm474, %v405, %v458
        %v478 = vsel %vm474, %v406, %v459
        %v479 = vsel %vm474, %v338, %v464
        %v480 = vsel %vm474, %v341, %v465
        %v481 = vsel %vm474, %v432, %v470
        %v482 = vsel %vm474, %v433, %v471
        %v483 = vpack.c.bf16 %v477, %v475
        %v484 = vpack.c.bf16 %v478, %v476
        %v485 = vpack.c.bf16 %v481, %v479
        %v486 = vpack.c.bf16 %v482, %v480
        %v487 = vpack.c.bf16 %v448, %v448
        %v488 = vpack.c.bf16 %v449, %v449
        %v489 = vld [vmem:[%s4] sm:$0xff]
        %491 = vset.pattern.permute.xlu0 0
        %492 = vperm.xlu0 %491, %v489
        %v493 = vpop.permute.xlu0 %492
        %vm495 = vcmask 293888
        %v497 = vsel %vm495, %v339, 0
        %vm499 = vcmask 1041408
        %v501 = vsel %vm499, %v487, 0
        %v504 = vsel %vm499, %v488, 0
        %506 = vmatprep.subr.bf16.mxu0 %v484
        %507 = vmatpush1.bf16.msra.mxu0 %v483
        %508 = vmatprep.subr.bf16.mxu0 %v486
        %509 = vmatpush1.bf16.msra.mxu0 %v485
        %510 = vmatprep.subr.bf16.mxu0 %v504
        %511 = vmatpush1.bf16.msra.mxu0 %v501
        %512 = vmatprep.subr.bf16.mxu0 0
        %513 = vmatpush1.bf16.msra.mxu0 0
        %514 = vmatprep.subr.bf16.mxu0 0
        %515 = vmatpush1.bf16.msra.mxu0 0
        %516 = vmatprep.subr.bf16.mxu0 0
        %517 = vmatpush1.bf16.msra.mxu0 0
        %518 = vmatprep.subr.bf16.mxu0 0
        %519 = vmatpush1.bf16.msra.mxu0 0
        %520 = vmatprep.subr.bf16.mxu0 0
        %521 = vmatpush1.bf16.msra.mxu0 0
        %522 = vmatprep.subr.bf16.mxu0 0
        %523 = vmatpush1.bf16.msra.mxu0 0
        %524 = vmatprep.subr.bf16.mxu0 0
        %525 = vmatpush1.bf16.msra.mxu0 0
        %526 = vmatprep.subr.bf16.mxu0 0
        %527 = vmatpush1.bf16.msra.mxu0 0
        %528 = vmatprep.subr.bf16.mxu0 0
        %529 = vmatpush1.bf16.msra.mxu0 0
        %530 = vmatprep.subr.bf16.mxu0 0
        %531 = vmatpush1.bf16.msra.mxu0 0
        %532 = vmatprep.subr.bf16.mxu0 0
        %533 = vmatpush1.bf16.msra.mxu0 0
        %534 = vmatprep.subr.bf16.mxu0 0
        %535 = vmatpush1.bf16.msra.mxu0 0
        %536 = vmatprep.subr.bf16.mxu0 0
        %537 = vmatpush1.bf16.msra.mxu0 0
        %538 = vmatprep.mubr.bf16.mxu0 0
        %539 = vmatmul.mubr.bf16.gmra.mrb[0].mxu0 %v497
        %v540 = vpop.f32.mrb[0].mxu0
        %v541 = vadd.f32 %v493, %v540
        %v542 = vpop.f32.mrb[0].mxu0
        %v543 = vadd.f32 %v493, %v542
        %v544 = vpop.f32.mrb[0].mxu0
        %v545 = vpop.f32.mrb[0].mxu0
        %546 = vdwg.mxu0
        %v547 = vmax.f32 %v541, 0.0
        %v548 = vmax.f32 %v543, 0.0
        %v549 = vld [vmem:[%s334] sm:$0x3]
        %v551 = vlaneseq
        %v552 = vshrl.u32 %v551, 7
        %v553 = vsub.s32 0, %v552
        %v554 = vrot.slane %v549, %v553
        %v555 = vlaneseq
        %v556 = vshrl.u32 %v555, 7
        %v557 = vsub.s32 1, %v556
        %v558 = vrot.slane %v549, %v557
        %v561 = vmul.f32 %v547, %v554
        %v562 = vmul.f32 %v548, %v558
        %v563 = vld [vmem:[%s5] sm:$0xf]
        %564 = vrot.lane.b32.xlu0 %v561, 17
        %v565 = vpop.permute.xlu0 %564
        %566 = vrot.lane.b32.xlu0 %v562, 17
        %v567 = vpop.permute.xlu0 %566
        %v568 = vsel %vm349, %v565, %v567
        %v569 = vsel %vm349, %v567, %v565
        %v570 = vmul.f32 %v569, %v366
        %v571 = vmul.f32 %v568, %v370
        %572 = vrot.lane.b32.xlu0 %v561, 16
        %v573 = vpop.permute.xlu0 %572
        %574 = vrot.lane.b32.xlu0 %v562, 16
        %v575 = vpop.permute.xlu0 %574
        %v576 = vsel %vm377, %v573, %v575
        %v577 = vsel %vm377, %v575, %v573
        %578 = vrot.lane.b32.xlu0 %v561, 15
        %v579 = vpop.permute.xlu0 %578
        %580 = vrot.lane.b32.xlu0 %v562, 15
        %v581 = vpop.permute.xlu0 %580
        %v582 = vsel %vm384, %v579, %v581
        %v583 = vsel %vm384, %v581, %v579
        %v584 = vmul.f32 %v583, %v400
        %v585 = vmul.f32 %v582, %v404
        %586 = vrot.lane.b32.xlu0 %v561, 1
        %v587 = vpop.permute.xlu0 %586
        %588 = vrot.lane.b32.xlu0 %v562, 1
        %v589 = vpop.permute.xlu0 %588
        %v590 = vsel %vm411, %v587, %v589
        %v591 = vsel %vm411, %v589, %v587
        %v592 = vmul.f32 %v591, %v366
        %v593 = vmul.f32 %v590, %v370
        %594 = vrot.lane.b32.xlu0 %v561, 127
        %v595 = vpop.permute.xlu0 %594
        %596 = vrot.lane.b32.xlu0 %v562, 127
        %v597 = vpop.permute.xlu0 %596
        %v598 = vsel %vm420, %v595, %v597
        %v599 = vsel %vm420, %v597, %v595
        %v600 = vmul.f32 %v598, %v400
        %v601 = vmul.f32 %v599, %v404
        %602 = vrot.lane.b32.xlu0 %v561, 113
        %v603 = vpop.permute.xlu0 %602
        %604 = vrot.lane.b32.xlu0 %v562, 113
        %v605 = vpop.permute.xlu0 %604
        %v606 = vsel %vm429, %v603, %v605
        %v607 = vsel %vm429, %v605, %v603
        %v608 = vmul.f32 %v606, %v366
        %v609 = vmul.f32 %v607, %v370
        %610 = vrot.lane.b32.xlu0 %v561, 112
        %v611 = vpop.permute.xlu0 %610
        %612 = vrot.lane.b32.xlu0 %v562, 112
        %v613 = vpop.permute.xlu0 %612
        %v614 = vsel %vm438, %v611, %v613
        %v615 = vsel %vm438, %v613, %v611
        %616 = vrot.lane.b32.xlu0 %v561, 111
        %v617 = vpop.permute.xlu0 %616
        %618 = vrot.lane.b32.xlu0 %v562, 111
        %v619 = vpop.permute.xlu0 %618
        %v620 = vsel %vm445, %v617, %v619
        %v621 = vsel %vm445, %v619, %v617
        %v622 = vmul.f32 %v620, %v400
        %v623 = vmul.f32 %v621, %v404
        %v624 = vpack.c.bf16 %v577, %v570
        %v625 = vpack.c.bf16 %v576, %v571
        %v626 = vpack.c.bf16 %v592, %v584
        %v627 = vpack.c.bf16 %v593, %v585
        %v628 = vpack.c.bf16 %v600, %v561
        %v629 = vpack.c.bf16 %v601, %v562
        %v630 = vpack.c.bf16 %v614, %v608
        %v631 = vpack.c.bf16 %v615, %v609
        %v632 = vpack.c.bf16 %v622, %v622
        %v633 = vpack.c.bf16 %v623, %v623
        %v634 = vld [vmem:[%s6] sm:$0xff]
        %636 = vset.pattern.permute.xlu0 0
        %637 = vperm.xlu0 %636, %v634
        %v638 = vpop.permute.xlu0 %637
        %vm640 = vcmask 588800
        %v642 = vsel %vm640, %v563, 0
        %v645 = vsel %vm474, %v632, 0
        %v648 = vsel %vm474, %v633, 0
        %650 = vmatprep.subr.bf16.mxu0 %v625
        %651 = vmatpush1.bf16.msra.mxu0 %v624
        %652 = vmatprep.subr.bf16.mxu0 %v627
        %653 = vmatpush1.bf16.msra.mxu0 %v626
        %654 = vmatprep.subr.bf16.mxu0 %v629
        %655 = vmatpush1.bf16.msra.mxu0 %v628
        %656 = vmatprep.subr.bf16.mxu0 %v631
        %657 = vmatpush1.bf16.msra.mxu0 %v630
        %658 = vmatprep.subr.bf16.mxu0 %v648
        %659 = vmatpush1.bf16.msra.mxu0 %v645
        %660 = vmatprep.subr.bf16.mxu0 0
        %661 = vmatpush1.bf16.msra.mxu0 0
        %662 = vmatprep.subr.bf16.mxu0 0
        %663 = vmatpush1.bf16.msra.mxu0 0
        %664 = vmatprep.subr.bf16.mxu0 0
        %665 = vmatpush1.bf16.msra.mxu0 0
        %666 = vmatprep.subr.bf16.mxu0 0
        %667 = vmatpush1.bf16.msra.mxu0 0
        %668 = vmatprep.subr.bf16.mxu0 0
        %669 = vmatpush1.bf16.msra.mxu0 0
        %670 = vmatprep.subr.bf16.mxu0 0
        %671 = vmatpush1.bf16.msra.mxu0 0
        %672 = vmatprep.subr.bf16.mxu0 0
        %673 = vmatpush1.bf16.msra.mxu0 0
        %674 = vmatprep.subr.bf16.mxu0 0
        %675 = vmatpush1.bf16.msra.mxu0 0
        %676 = vmatprep.subr.bf16.mxu0 0
        %677 = vmatpush1.bf16.msra.mxu0 0
        %678 = vmatprep.subr.bf16.mxu0 0
        %679 = vmatpush1.bf16.msra.mxu0 0
        %680 = vmatprep.subr.bf16.mxu0 0
        %681 = vmatpush1.bf16.msra.mxu0 0
        %682 = vmatprep.mubr.bf16.mxu0 0
        %683 = vmatmul.mubr.bf16.gmra.mrb[0].mxu0 %v642
        %v684 = vpop.f32.mrb[0].mxu0
        %v685 = vadd.f32 %v638, %v684
        %v686 = vpop.f32.mrb[0].mxu0
        %v687 = vadd.f32 %v638, %v686
        %v688 = vpop.f32.mrb[0].mxu0
        %v689 = vpop.f32.mrb[0].mxu0
        %690 = vdwg.mxu0
        %v691 = vmax.f32 %v685, 0.0
        %v692 = vmax.f32 %v687, 0.0
        %695 = vrot.lane.b32.xlu0 %v691, 96
        %v696 = vpop.permute.xlu0 %695
        %697 = vrot.lane.b32.xlu0 %v692, 96
        %v698 = vpop.permute.xlu0 %697
        %vm699 = vcmask 785408
        %v700 = vsel %vm699, %v696, %v698
        %702 = vst [vmem:[%s321] sm:$0xff] %v700
        %s703 = sand.u32 %s203, 1
        %s704 = scalar_lea.sflag [#allocation4], %s703
        %s705 = sand.u32 %s203, 1
        %s706 = smul.addr %s705, 8
        %s707 = scalar_lea.vmem [#allocation5], %s706
        // Predicated region
        $region53: #{tpu_custom_call.1} parent=47 // pred_check
          %p708 = pneg %p213
        $region54: #{tpu_custom_call.1} parent=47 // pred_check_branch
          %710 = sbr.rel (%p708) target = $region56
        $region55: #{tpu_custom_call.1} parent=47 // pred_region
          %s712 = ssub.s32 128, 128
          %713 = vsyncadd %s704, %s712
          %s714 = smul.addr %s26, 2
          %s715 = sadd.s32 %s27, %s714
          %s716 = smul.addr %s715, 128
          %s717 = scalar_lea.hbm %s7, %s716
          %s719 = sshll.u32 %s707, 4
          %s720 = int_to_ptr.vmem [resolvable:$true] %s719
          %722 = dma.vmem_to_hbm [thread:$0]  %s720, 128, %s717, %s704
        $region56: #{tpu_custom_call.1} parent=47 // pred_fallthru
          _
      $region48: #{tpu_custom_call.1} parent=5 // pred_fallthru
        _
      %p723 = scmp.le.s32.totalorder 2, %s17
      // Predicated region
      $region57: #{tpu_custom_call.1} parent=5 // pred_check
        %p724 = pneg %p723
      $region58: #{tpu_custom_call.1} parent=5 // pred_check_branch
        %726 = sbr.rel (%p724) target = $region60
      $region59: #{tpu_custom_call.1} parent=5 // pred_region
        %s727 = ssub.s32 %s17, 2
        // Predicated region
        $region61: #{tpu_custom_call.1} parent=59 // pred_check
          %p728 = pneg %p219
        $region62: #{tpu_custom_call.1} parent=59 // pred_check_branch
          %730 = sbr.rel (%p728) target = $region64
        $region63: #{tpu_custom_call.1} parent=59 // pred_region
          %s731 = sand.u32 %s204, 1
          %s732 = scalar_lea.sflag [#allocation4], %s731
          %s733 = sand.u32 %s204, 1
          %s734 = smul.addr %s733, 8
          %s735 = scalar_lea.vmem [#allocation5], %s734
          %736 = dma.done %s732, 128
        $region64: #{tpu_custom_call.1} parent=59 // pred_fallthru
          _
      $region60: #{tpu_custom_call.1} parent=5 // pred_fallthru
        _
    $region6: #{tpu_custom_call.1} parent=1 // loop_footer
      %s21 = sadd.s32 1, %s17
    $region7: #{tpu_custom_call.1} parent=1 // loop_footer_branch
      %16 = sbr.rel target = $region3
    $region8: #{tpu_custom_call.1} parent=1 // loop_exit
      _
    %737 = vsyncpa [#allocation3], 1
    %s738 = scalar_lea.sflag [#allocation3], 1
    %739 = vsyncpa %s738, 1
    %740 = vsyncpa [#allocation4], 1
    %s741 = scalar_lea.sflag [#allocation4], 1
    %742 = vsyncpa %s741, 1

</llo_original>
